<compile_context>
chip_gen: v7x
topology: tpu7x:2x2x1
jax: 0.10.0
libtpu: 0.0.40
codegen_flags: <defaults>
</compile_context>

<pallas_src>
import functools

import jax
import jax.numpy as jnp
import numpy as np
from jax.experimental import pallas as pl
from jax.experimental.pallas import tpu as pltpu

_VMEM_LIMIT = 32 * 1024 * 1024  # above v5e's 16 MiB default scoped limit


def _round_up(x, m):
    return (x + m - 1) // m * m


def _pick_tm(mg, cap=2048):
    # >=2 grid blocks (v7x has 2 TensorCores) and a cap to bound VMEM.
    return max(16, min(cap, _round_up(-(-mg // 2), 16)))


# ---------------------------------------------------------------------------
# Pallas kernel 1: plain matmul + bias + optional ReLU (single full-K block).
# Used for conv1 only (C=1 -> K=25), where tap-splitting would be
# accumulator-traffic bound.
# ---------------------------------------------------------------------------
def _mm_bias_act_kernel(a_ref, b_ref, bias_ref, o_ref, *, relu):
    acc = jnp.dot(a_ref[...], b_ref[...], preferred_element_type=jnp.float32)
    acc = acc + bias_ref[...]
    if relu:
        acc = jnp.maximum(acc, 0.0)
    o_ref[...] = acc.astype(o_ref.dtype)


def pallas_matmul_bias(a, b, bias, *, relu=False, out_dtype=jnp.float32):
    """out = relu?(a @ b + bias).  a:(M,K) b:(K,N) bias:(1,N)|(N,)."""
    M, K = a.shape
    K2, N = b.shape
    assert K == K2
    a_bf = a.astype(jnp.bfloat16)
    b_bf = b.astype(jnp.bfloat16)
    bias2 = bias.astype(jnp.float32).reshape(1, N)

    tn = min(N, 256) if N % 128 == 0 else N
    vmem_cap = max(16, ((4 * 1024 * 1024) // (K * 2)) // 16 * 16)
    tm = max(16, min(2048, _round_up(-(-M // 2), 16), vmem_cap))
    grid = (pl.cdiv(M, tm), pl.cdiv(N, tn))

    cost = pl.CostEstimate(
        flops=2 * M * N * K, transcendentals=0,
        bytes_accessed=int(M * K * 2 + K * N * 2
                           + M * N * jnp.dtype(out_dtype).itemsize))

    return pl.pallas_call(
        functools.partial(_mm_bias_act_kernel, relu=relu),
        out_shape=jax.ShapeDtypeStruct((M, N), out_dtype),
        grid_spec=pltpu.PrefetchScalarGridSpec(
            num_scalar_prefetch=0, grid=grid,
            in_specs=[pl.BlockSpec((tm, K), lambda i, j: (i, 0)),
                      pl.BlockSpec((K, tn), lambda i, j: (0, j)),
                      pl.BlockSpec((1, tn), lambda i, j: (0, j))],
            out_specs=pl.BlockSpec((tm, tn), lambda i, j: (i, j))),
        compiler_params=pltpu.CompilerParams(
            dimension_semantics=("parallel", "parallel"),
            vmem_limit_bytes=_VMEM_LIMIT),
        cost_estimate=cost,
    )(a_bf, b_bf, bias2)


# ---------------------------------------------------------------------------
# Pallas kernel 2: "row-tap" conv GEMM.
# The whole row-patch panel P (rows = flattened (n, h, w8), cols = KW*C) sits
# in VMEM as a constant-index block; each grid step computes a tm-row slab of
# the output by accumulating the KH row taps (shifted slices of P) in f32.
# ---------------------------------------------------------------------------
def _rowtap_kernel(p_ref, w_ref, b_ref, o_ref, *, kh, shift, relu):
    tm = o_ref.shape[0]
    m0 = pl.program_id(0) * tm
    acc = jnp.zeros(o_ref.shape, jnp.float32)
    for i in range(kh):
        start = pl.multiple_of(m0 + i * shift, 8)
        a = p_ref[pl.ds(start, tm), :]
        acc = acc + jnp.dot(a, w_ref[i], preferred_element_type=jnp.float32)
    acc = acc + b_ref[...]
    if relu:
        acc = jnp.maximum(acc, 0.0)
    o_ref[...] = acc.astype(o_ref.dtype)


def conv_rowtap(x, w_rt, b_rt, *, kh, kw, pad=(0, 0), relu=True,
                out_dtype=jnp.bfloat16):
    """Valid NHWC conv after explicit padding, fused bias (+ReLU).

    w_rt: (kh, kw*C, OC) bf16 (column order j*C + c), b_rt: (1, OC) f32.
    Only a KW-wide row-patch matrix is materialized in XLA; the KH-tap
    contraction happens inside the Pallas kernel (no KH*KW im2col in HBM).
    """
    x = x.astype(jnp.bfloat16)
    ph, pw = pad
    if ph or pw:
        x = jnp.pad(x, ((0, 0), (ph, ph), (pw, pw), (0, 0)))
    N, HP, WP, C = x.shape
    OH, OW = HP - kh + 1, WP - kw + 1
    OC = w_rt.shape[-1]
    kt = kw * C
    ow8 = _round_up(OW, 8)          # row stride -> sublane-aligned tap shifts

    # W-direction-only im2col: (N, HP, ow8, kw*C), zero padded in the W tail.
    cols = jnp.concatenate([x[:, :, j:j + OW, :] for j in range(kw)], axis=-1)
    cols = jnp.pad(cols, ((0, 0), (0, 0), (0, ow8 - OW), (0, 0)))

    mg = N * HP * ow8               # rows of the (uncropped) output grid
    tm = _pick_tm(mg)
    nb = -(-mg // tm)
    p_rows = nb * tm + (kh - 1) * ow8
    p = jnp.pad(cols.reshape(mg, kt), ((0, p_rows - mg), (0, 0)))

    cost = pl.CostEstimate(
        flops=2 * nb * tm * kt * kh * OC, transcendentals=0,
        bytes_accessed=int(p.size * 2 + w_rt.size * 2
                           + nb * tm * OC * jnp.dtype(out_dtype).itemsize))

    out = pl.pallas_call(
        functools.partial(_rowtap_kernel, kh=kh, shift=ow8, relu=relu),
        out_shape=jax.ShapeDtypeStruct((nb * tm, OC), out_dtype),
        grid_spec=pltpu.PrefetchScalarGridSpec(
            num_scalar_prefetch=0, grid=(nb,),
            in_specs=[pl.BlockSpec((p_rows, kt), lambda m: (0, 0)),
                      pl.BlockSpec((kh, kt, OC), lambda m: (0, 0, 0)),
                      pl.BlockSpec((1, OC), lambda m: (0, 0))],
            out_specs=pl.BlockSpec((tm, OC), lambda m: (m, 0))),
        compiler_params=pltpu.CompilerParams(
            dimension_semantics=("parallel",),
            vmem_limit_bytes=_VMEM_LIMIT),
        cost_estimate=cost,
    )(p, w_rt, b_rt)
    # Crop the padded/garbage rows & columns (fuses into the consumer).
    return out[:mg].reshape(N, HP, ow8, OC)[:, :OH, :OW, :]


# ---------------------------------------------------------------------------
# Layer helpers built on the kernels (NHWC activations, bf16 between layers).
# ---------------------------------------------------------------------------
def _im2col_nhwc(x, kh, kw):
    """x: (N,H,W,C) -> ((N*OH*OW, kh*kw*C), (N, OH, OW)).  Valid patches."""
    N, H, W, C = x.shape
    OH, OW = H - kh + 1, W - kw + 1
    cols = [x[:, i:i + OH, j:j + OW, :] for i in range(kh) for j in range(kw)]
    p = jnp.concatenate(cols, axis=-1)
    return p.reshape(N * OH * OW, kh * kw * C), (N, OH, OW)


def maxpool2x2(x):
    # TODO(synk): fuse bias+ReLU+2x2 maxpool into the conv GEMM epilogue (perf item 6).
    N, H, W, C = x.shape
    H2, W2 = H // 2, W // 2
    x = x[:, :H2 * 2, :W2 * 2, :]
    return x.reshape(N, H2, 2, W2, 2, C).max(axis=(2, 4))


def deconv_s2(x, p, *, relu, out_dtype=jnp.bfloat16):
    """ConvTranspose2d(stride=2, k=5, pad=0) via the 4-phase sub-pixel GEMM."""
    N, H, W, _ = x.shape
    cout = p["w"].shape[-1] // 4
    out = conv_rowtap(x, p["w"], p["b"], kh=3, kw=3, pad=(2, 2), relu=relu,
                      out_dtype=out_dtype)            # (N, H+2, W+2, 4*cout)
    PH, PW = H + 2, W + 2
    out = out.reshape(N, PH, PW, 2, 2, cout)
    out = out.transpose(0, 1, 3, 2, 4, 5).reshape(N, 2 * PH, 2 * PW, cout)
    return out[:, :2 * H + 3, :2 * W + 3, :]


def _adaptive_pool_matrix(in_size, out_size):
    P = np.zeros((out_size, in_size), dtype=np.float32)
    for i in range(out_size):
        start = (i * in_size) // out_size
        end = -(-((i + 1) * in_size) // out_size)
        P[i, start:end] = 1.0 / (end - start)
    return jnp.asarray(P)


def adaptive_avg_pool2d(x, out_hw):
    """x: (N, H, W) f32 -> (N, OH, OW).  Tiny op -> plain XLA dots."""
    OH, OW = out_hw
    Ph = _adaptive_pool_matrix(x.shape[1], OH)
    Pw = _adaptive_pool_matrix(x.shape[2], OW)
    t = jnp.einsum('nhw,vw->nhv', x, Pw)
    return jnp.einsum('uh,nhv->nuv', Ph, t)


# ---------------------------------------------------------------------------
# Parameter init (torch layouts) + one-time GEMM-ready weight preparation.
# ---------------------------------------------------------------------------
def init_params(key):
    specs = {
        # name: (weight_shape, fan_in)   conv: (OC,C,k,k), deconv: (Cin,Cout,k,k)
        "conv1":   ((32, 1, 5, 5),     1 * 25),
        "conv2":   ((64, 32, 5, 5),    32 * 25),
        "conv3":   ((128, 64, 5, 5),   64 * 25),
        "conv4":   ((256, 128, 5, 5),  128 * 25),
        "conv5":   ((512, 256, 3, 3),  256 * 9),
        "deconv1": ((512, 256, 3, 3),  512 * 9),
        "deconv2": ((256, 128, 5, 5),  256 * 25),
        "deconv3": ((128, 64, 5, 5),   128 * 25),
        "deconv4": ((64, 32, 5, 5),    64 * 25),
        "deconv5": ((32, 32, 5, 5),    32 * 25),
        "deconv6": ((32, 1, 5, 5),     32 * 25),
    }
    params = {}
    for idx, (name, (wshape, fan_in)) in enumerate(specs.items()):
        kw_, kb_ = jax.random.split(jax.random.fold_in(key, idx))
        oc = wshape[0] if name.startswith("conv") else wshape[1]
        scale = 1.0 / np.sqrt(fan_in)
        params[name] = {
            "w": jax.random.normal(kw_, wshape, jnp.float32) * scale,
            "b": jax.random.normal(kb_, (oc,), jnp.float32) * 0.01,
        }
    return params


def _prep_conv1(w, b):
    oc, c, kh, kw = w.shape
    wm = jnp.transpose(w, (2, 3, 1, 0)).reshape(kh * kw * c, oc).astype(jnp.bfloat16)
    return {"w": wm, "b": b.astype(jnp.float32).reshape(1, oc)}


def _prep_conv(w, b):
    oc, c, kh, kw = w.shape
    w_rt = jnp.transpose(w, (2, 3, 1, 0)).reshape(kh, kw * c, oc).astype(jnp.bfloat16)
    return {"w": w_rt, "b": b.astype(jnp.float32).reshape(1, oc)}


def _prep_deconv_s1(w, b):
    # ConvTranspose2d stride 1 == conv with spatially flipped kernel, io swapped.
    w_conv = jnp.transpose(jnp.flip(w, (2, 3)), (1, 0, 2, 3))
    return _prep_conv(w_conv, b)


def _subpixel_weight_s2k5(w):
    """ConvTranspose2d(stride=2, k=5, pad=0) weight (Cin,Cout,5,5) ->
    combined 4-phase 3x3 conv weight (3, 3*Cin, 4*Cout), phase-major columns.

    Phase (ry,rx) output at y=2*oy+ry, x=2*ox+rx is a valid 3x3 conv of the
    pad-2 input with taps W[:, :, 4+ry-2u, 4+rx-2v] (zero when out of range)."""
    cin, cout, kh, kw = w.shape
    assert kh == 5 and kw == 5
    phases = []
    for ry in range(2):
        for rx in range(2):
            wp = jnp.zeros((3, 3, cin, cout), w.dtype)
            for u in range(3):
                i = 4 + ry - 2 * u
                if not (0 <= i < 5):
                    continue
                for v in range(3):
                    j = 4 + rx - 2 * v
                    if not (0 <= j < 5):
                        continue
                    wp = wp.at[u, v].set(w[:, :, i, j])
            phases.append(wp)
    wc = jnp.concatenate(phases, axis=-1)            # (3, 3, Cin, 4*Cout)
    return wc.reshape(3, 3 * cin, 4 * cout)


def _prep_deconv_s2(w, b):
    cin, cout, kh, kw = w.shape
    w_rt = _subpixel_weight_s2k5(w).astype(jnp.bfloat16)
    b_rt = jnp.tile(b, 4).astype(jnp.float32).reshape(1, 4 * cout)
    return {"w": w_rt, "b": b_rt}


def prepare_params(params):
    """One-time (hoisted out of the jitted forward) GEMM-ready weight prep."""
    prep = {"conv1": _prep_conv1(params["conv1"]["w"], params["conv1"]["b"])}
    for name in ("conv2", "conv3", "conv4", "conv5"):
        prep[name] = _prep_conv(params[name]["w"], params[name]["b"])
    prep["deconv1"] = _prep_deconv_s1(params["deconv1"]["w"], params["deconv1"]["b"])
    for name in ("deconv2", "deconv3", "deconv4", "deconv5", "deconv6"):
        prep[name] = _prep_deconv_s2(params[name]["w"], params[name]["b"])
    return prep


# ---------------------------------------------------------------------------
# Forward pass.
# ---------------------------------------------------------------------------
def bumblebee_forward(prep, x):
    # TODO(synk): cross-pallas_call weight-prefetch futures for the tiny
    # conv4..deconv2 layers (perf item 8) are not implemented.
    h = x[:, :, :, None].astype(jnp.bfloat16)

    # conv1: C=1 (K=25) -> plain im2col GEMM (row-tap would be acc-bound).
    a, (n, oh, ow) = _im2col_nhwc(h, 5, 5)
    h = pallas_matmul_bias(a, prep["conv1"]["w"], prep["conv1"]["b"],
                           relu=True, out_dtype=jnp.bfloat16)
    h = maxpool2x2(h.reshape(n, oh, ow, -1))

    for name in ("conv2", "conv3", "conv4"):
        p = prep[name]
        h = maxpool2x2(conv_rowtap(h, p["w"], p["b"], kh=5, kw=5, relu=True))

    p = prep["conv5"]
    h = maxpool2x2(conv_rowtap(h, p["w"], p["b"], kh=3, kw=3, pad=(0, 1), relu=True))

    p = prep["deconv1"]       # stride-1 transposed conv == conv with pad (2, 1)
    h = conv_rowtap(h, p["w"], p["b"], kh=3, kw=3, pad=(2, 1), relu=True)

    for name in ("deconv2", "deconv3", "deconv4", "deconv5"):
        h = deconv_s2(h, prep[name], relu=True)
    h = deconv_s2(h, prep["deconv6"], relu=False, out_dtype=jnp.float32)

    y = h[:, :, :, 0].astype(jnp.float32)      # squeeze(1) in NCHW terms
    # TODO(synk): nn.MaxUnpool2d is declared in __init__ but unused in forward.
    return adaptive_avg_pool2d(y, (143, 111))


# ---------------------------------------------------------------------------
# Pure-XLA f32 reference (for correctness checks only).
# ---------------------------------------------------------------------------
def _ref_conv(x, w, b, padding, relu):
    rhs = jnp.transpose(w, (2, 3, 1, 0))                       # HWIO
    y = jax.lax.conv_general_dilated(
        x, rhs, window_strides=(1, 1),
        padding=[(padding[0], padding[0]), (padding[1], padding[1])],
        dimension_numbers=('NHWC', 'HWIO', 'NHWC'),
        precision=jax.lax.Precision.HIGHEST)
    y = y + b
    return jnp.maximum(y, 0.0) if relu else y


def _ref_deconv(x, w, b, stride, padding, relu):
    kh, kw = w.shape[2], w.shape[3]
    rhs = jnp.transpose(jnp.flip(w, (2, 3)), (2, 3, 0, 1))     # HWIO, I=Cin
    y = jax.lax.conv_general_dilated(
        x, rhs, window_strides=(1, 1),
        padding=[(kh - 1 - padding[0],) * 2, (kw - 1 - padding[1],) * 2],
        lhs_dilation=(stride, stride),
        dimension_numbers=('NHWC', 'HWIO', 'NHWC'),
        precision=jax.lax.Precision.HIGHEST)
    y = y + b
    return jnp.maximum(y, 0.0) if relu else y


def _ref_pool(x):
    return jax.lax.reduce_window(x, -jnp.inf, jax.lax.max,
                                 (1, 2, 2, 1), (1, 2, 2, 1), 'VALID')


def bumblebee_reference(params, x):
    h = x[:, :, :, None]
    h = _ref_pool(_ref_conv(h, params["conv1"]["w"], params["conv1"]["b"], (0, 0), True))
    h = _ref_pool(_ref_conv(h, params["conv2"]["w"], params["conv2"]["b"], (0, 0), True))
    h = _ref_pool(_ref_conv(h, params["conv3"]["w"], params["conv3"]["b"], (0, 0), True))
    h = _ref_pool(_ref_conv(h, params["conv4"]["w"], params["conv4"]["b"], (0, 0), True))
    h = _ref_pool(_ref_conv(h, params["conv5"]["w"], params["conv5"]["b"], (0, 1), True))
    h = _ref_deconv(h, params["deconv1"]["w"], params["deconv1"]["b"], 1, (0, 1), True)
    h = _ref_deconv(h, params["deconv2"]["w"], params["deconv2"]["b"], 2, (0, 0), True)
    h = _ref_deconv(h, params["deconv3"]["w"], params["deconv3"]["b"], 2, (0, 0), True)
    h = _ref_deconv(h, params["deconv4"]["w"], params["deconv4"]["b"], 2, (0, 0), True)
    h = _ref_deconv(h, params["deconv5"]["w"], params["deconv5"]["b"], 2, (0, 0), True)
    h = _ref_deconv(h, params["deconv6"]["w"], params["deconv6"]["b"], 2, (0, 0), False)
    y = h[:, :, :, 0]
    Ph = _adaptive_pool_matrix(y.shape[1], 143)
    Pw = _adaptive_pool_matrix(y.shape[2], 111)
    t = jnp.einsum('nhw,vw->nhv', y, Pw, precision=jax.lax.Precision.HIGHEST)
    return jnp.einsum('uh,nhv->nuv', Ph, t, precision=jax.lax.Precision.HIGHEST)


if __name__ == "__main__":
    key = jax.random.PRNGKey(0)
    params = init_params(jax.random.fold_in(key, 123))
    prep = prepare_params(params)

    # --- Sub-pixel stride-2 ConvTranspose2d path vs XLA reference. ---
    kx, kwd, kbd = (jax.random.fold_in(key, i) for i in (11, 12, 13))
    xd = jax.random.normal(kx, (2, 9, 5, 16), jnp.float32)
    wd = jax.random.normal(kwd, (16, 8, 5, 5), jnp.float32) * 0.1
    bd = jax.random.normal(kbd, (8,), jnp.float32) * 0.1
    got_d = deconv_s2(xd, _prep_deconv_s2(wd, bd), relu=False, out_dtype=jnp.float32)
    ref_d = _ref_deconv(xd, wd, bd, 2, (0, 0), False)
    got_d = jax.block_until_ready(got_d)
    rel_d = float(jnp.linalg.norm(got_d - ref_d) / jnp.linalg.norm(ref_d))
    assert rel_d < 2e-2, f"deconv_s2 mismatch vs reference: rel={rel_d}"

    # --- Full forward vs f32 XLA reference. ---
    # Smallest convenient input surviving 5x (conv k5 + pool/2): (2, 128, 96).
    x = jax.random.normal(jax.random.fold_in(key, 7), (2, 128, 96), jnp.float32)
    fwd = jax.jit(bumblebee_forward)
    y = jax.block_until_ready(fwd(prep, x))
    assert y.shape == (2, 143, 111), y.shape
    assert bool(jnp.all(jnp.isfinite(y)))

    ref = jax.jit(bumblebee_reference)(params, x)
    rel = float(jnp.linalg.norm(y - ref) / jnp.linalg.norm(ref))
    assert rel < 1e-1, f"full forward mismatch vs f32 reference: rel={rel}"
    print("KERNEL_OK")
</pallas_src>

<mosaic_0001>
module attributes {stable_mosaic.version = 11 : i64} {
  func.func @_rowtap_kernel(%arg0: i32, %arg1: memref<240x48xbf16, #tpu.memory_space<vmem>>, %arg2: memref<3x48x32xbf16, #tpu.memory_space<vmem>>, %arg3: memref<1x32xf32, #tpu.memory_space<vmem>>, %arg4: memref<112x32xf32, #tpu.memory_space<vmem>>) attributes {dimension_semantics = [#tpu.dimension_semantics<parallel>], iteration_bounds = array<i64: 2>, scalar_prefetch = 0 : i64, scratch_operands = 0 : i64, tpu.core_type = #tpu.core_type<tc>, window_params = [{pipeline_mode = #tpu.pipeline_mode<synchronous>, transform_indices = @transform_0, window_bounds = array<i64: 240, 48>}, {pipeline_mode = #tpu.pipeline_mode<synchronous>, transform_indices = @transform_1, window_bounds = array<i64: 3, 48, 32>}, {pipeline_mode = #tpu.pipeline_mode<synchronous>, transform_indices = @transform_2, window_bounds = array<i64: 1, 32>}, {transform_indices = @transform_3, window_bounds = array<i64: 112, 32>}]} {
    %c112_i32 = arith.constant 112 : i32
    %0 = arith.muli %arg0, %c112_i32 : i32
    %cst = arith.constant 0.000000e+00 : f32
    %1 = vector.broadcast %cst : f32 to vector<112x32xf32>
    %c0_i32 = arith.constant 0 : i32
    %2 = arith.addi %0, %c0_i32 : i32
    %3 = tpu.assume_multiple %2, 8 : i32
    %4 = arith.index_cast %3 : i32 to index
    %c0 = arith.constant 0 : index
    %5 = vector.load %arg1[%4, %c0] : memref<240x48xbf16, #tpu.memory_space<vmem>>, vector<112x48xbf16>
    %c0_0 = arith.constant 0 : index
    %c0_1 = arith.constant 0 : index
    %c0_2 = arith.constant 0 : index
    %6 = vector.load %arg2[%c0_0, %c0_1, %c0_2] : memref<3x48x32xbf16, #tpu.memory_space<vmem>>, vector<1x48x32xbf16>
    %7 = vector.shape_cast %6 : vector<1x48x32xbf16> to vector<48x32xbf16>
    %cst_3 = arith.constant dense<0.000000e+00> : vector<112x32xf32>
    %8 = tpu.matmul %5, %7, %cst_3 {dimension_numbers = #tpu.dot_dimension_numbers<[1], [0], [0], [1], [0, 0, 1, 1], [], []>} : vector<112x48xbf16>, vector<48x32xbf16>, vector<112x32xf32> -> vector<112x32xf32>
    %9 = arith.addf %1, %8 : vector<112x32xf32>
    %c8_i32 = arith.constant 8 : i32
    %10 = arith.addi %0, %c8_i32 : i32
    %11 = tpu.assume_multiple %10, 8 : i32
    %12 = arith.index_cast %11 : i32 to index
    %c0_4 = arith.constant 0 : index
    %13 = vector.load %arg1[%12, %c0_4] : memref<240x48xbf16, #tpu.memory_space<vmem>>, vector<112x48xbf16>
    %c1 = arith.constant 1 : index
    %c0_5 = arith.constant 0 : index
    %c0_6 = arith.constant 0 : index
    %14 = vector.load %arg2[%c1, %c0_5, %c0_6] : memref<3x48x32xbf16, #tpu.memory_space<vmem>>, vector<1x48x32xbf16>
    %15 = vector.shape_cast %14 : vector<1x48x32xbf16> to vector<48x32xbf16>
    %cst_7 = arith.constant dense<0.000000e+00> : vector<112x32xf32>
    %16 = tpu.matmul %13, %15, %cst_7 {dimension_numbers = #tpu.dot_dimension_numbers<[1], [0], [0], [1], [0, 0, 1, 1], [], []>} : vector<112x48xbf16>, vector<48x32xbf16>, vector<112x32xf32> -> vector<112x32xf32>
    %17 = arith.addf %9, %16 : vector<112x32xf32>
    %c16_i32 = arith.constant 16 : i32
    %18 = arith.addi %0, %c16_i32 : i32
    %19 = tpu.assume_multiple %18, 8 : i32
    %20 = arith.index_cast %19 : i32 to index
    %c0_8 = arith.constant 0 : index
    %21 = vector.load %arg1[%20, %c0_8] : memref<240x48xbf16, #tpu.memory_space<vmem>>, vector<112x48xbf16>
    %c2 = arith.constant 2 : index
    %c0_9 = arith.constant 0 : index
    %c0_10 = arith.constant 0 : index
    %22 = vector.load %arg2[%c2, %c0_9, %c0_10] : memref<3x48x32xbf16, #tpu.memory_space<vmem>>, vector<1x48x32xbf16>
    %23 = vector.shape_cast %22 : vector<1x48x32xbf16> to vector<48x32xbf16>
    %cst_11 = arith.constant dense<0.000000e+00> : vector<112x32xf32>
    %24 = tpu.matmul %21, %23, %cst_11 {dimension_numbers = #tpu.dot_dimension_numbers<[1], [0], [0], [1], [0, 0, 1, 1], [], []>} : vector<112x48xbf16>, vector<48x32xbf16>, vector<112x32xf32> -> vector<112x32xf32>
    %25 = arith.addf %17, %24 : vector<112x32xf32>
    %c0_12 = arith.constant 0 : index
    %c0_13 = arith.constant 0 : index
    %26 = vector.load %arg3[%c0_12, %c0_13] : memref<1x32xf32, #tpu.memory_space<vmem>>, vector<1x32xf32>
    %27 = vector.broadcast %26 : vector<1x32xf32> to vector<112x32xf32>
    %28 = arith.addf %25, %27 : vector<112x32xf32>
    %c0_14 = arith.constant 0 : index
    %c0_15 = arith.constant 0 : index
    %29 = vector.load %arg4[%c0_14, %c0_15] : memref<112x32xf32, #tpu.memory_space<vmem>>, vector<112x32xf32>
    tpu.vector_store %arg4[%c0_14, %c0_15], %28 {strides = array<i32>} : memref<112x32xf32, #tpu.memory_space<vmem>>, vector<112x32xf32>,
    return
  }
  func.func @transform_0(%arg0: i32) -> (i32, i32) {
    %c0_i32 = arith.constant 0 : i32
    %c0_i32_0 = arith.constant 0 : i32
    %c0_i32_1 = arith.constant 0 : i32
    return %c0_i32, %c0_i32_0 : i32, i32
  }
  func.func @transform_1(%arg0: i32) -> (i32, i32, i32) {
    %c0_i32 = arith.constant 0 : i32
    %c0_i32_0 = arith.constant 0 : i32
    %c0_i32_1 = arith.constant 0 : i32
    %c0_i32_2 = arith.constant 0 : i32
    return %c0_i32, %c0_i32_0, %c0_i32_1 : i32, i32, i32
  }
  func.func @transform_2(%arg0: i32) -> (i32, i32) {
    %c0_i32 = arith.constant 0 : i32
    %c0_i32_0 = arith.constant 0 : i32
    %c0_i32_1 = arith.constant 0 : i32
    return %c0_i32, %c0_i32_0 : i32, i32
  }
  func.func @transform_3(%arg0: i32) -> (i32, i32) {
    %c0_i32 = arith.constant 0 : i32
    %c0_i32_0 = arith.constant 0 : i32
    return %arg0, %c0_i32 : i32, i32
  }
}

</mosaic_0001>

<llo_original>
// kernel: tpu_custom_call.1
$region0: #{tpu_custom_call.1}
  #allocation0 [shape = 'u32[]', space=smem, size = 0x4, offset = 0x4, fixed_abs, tag = 'smem constant byte address 0x4 - core index']
  #allocation1 [shape = 'u32[144,128]{1,0:T(1,128)}', space=vmem, size = 0x12000, scoped, tag = 'internal scratch']
  %s0 = inlined_call_operand.vmem [shape: bf16[240,48], index: 0, kind: input, shape index: {}]
  %s1 = inlined_call_operand.vmem [shape: bf16[3,48,32], index: 1, kind: input, shape index: {}]
  %s2 = inlined_call_operand.vmem [shape: f32[1,32], index: 2, kind: input, shape index: {}]
  %s3 = inlined_call_operand.vmem [shape: f32[224,32], index: 3, kind: output, shape index: {}]
  %s4 = sld [smem:[#allocation0]]
  $region45: #{tpu_custom_call.1} parent=0
    _
  %s6 = ssub.s32 1, %s4
  %s7 = scalar_select 0, %s6, %s4
  loop: start=0, step=1, limit=4
  $region2: #{tpu_custom_call.1} parent=0 // loop_pre_header
    _
  $region3: #{tpu_custom_call.1} parent=0 // loop_header
    %s9 = sphi 0, %s13
    %p10 = scmp.ge.s32.totalorder %s9, 4
    %s17 = sphi 0, %s17
    %s19 = sphi 0, %s17
    %s20 = sphi 0, %s19
    %s34 = sphi 0, %s20
    %s38 = sphi 0, %s38
    %s40 = sphi 0, %s38
    %s41 = sphi 0, %s40
    %s55 = sphi 0, %s41
    %s59 = sphi 0, %s59
    %s61 = sphi 0, %s59
    %s62 = sphi 0, %s61
    %s76 = sphi 0, %s62
    %s82 = sphi 0, %s84
    %s85 = sphi 0, %s82
    %s86 = sphi 0, %s85
    %s102 = sphi 0, %s86
  $region4: #{tpu_custom_call.1} parent=0 // loop_header_branch
    %12 = sbr.rel (%p10) target = $region8
  $region5: #{tpu_custom_call.1} parent=0 // loop_body
    %s14 = ssub.s32 %s9, 1
    %s15 = ssub.s32 %s9, 2
    %s16 = sadd.s32 %s9, 1
    %s18 = sadd.s32 %s17, 1
    %p21 = scmp.eq.s32.totalorder %s9, 1
    %p22 = scmp.ne.s32.totalorder %s17, %s19
    %p23 = scmp.eq.s32.totalorder %s9, 0
    %p24 = por %p22, %p23
    %p25 = scmp.ne.s32.totalorder %s17, %s19
    %p26 = scmp.eq.s32.totalorder %s14, 1
    %p27 = por %p25, %p26
    %p28 = scmp.ne.s32.totalorder %s19, %s20
    %p29 = scmp.eq.s32.totalorder %s14, 0
    %p30 = por %p28, %p29
    %p31 = scmp.ne.s32.totalorder %s19, %s20
    %p32 = scmp.eq.s32.totalorder %s15, 1
    %p33 = por %p31, %p32
    %p35 = scmp.ne.s32.totalorder %s20, %s34
    %p36 = scmp.eq.s32.totalorder %s15, 0
    %p37 = por %p35, %p36
    %s39 = sadd.s32 %s38, 1
    %p42 = scmp.eq.s32.totalorder %s9, 1
    %p43 = scmp.ne.s32.totalorder %s38, %s40
    %p44 = scmp.eq.s32.totalorder %s9, 0
    %p45 = por %p43, %p44
    %p46 = scmp.ne.s32.totalorder %s38, %s40
    %p47 = scmp.eq.s32.totalorder %s14, 1
    %p48 = por %p46, %p47
    %p49 = scmp.ne.s32.totalorder %s40, %s41
    %p50 = scmp.eq.s32.totalorder %s14, 0
    %p51 = por %p49, %p50
    %p52 = scmp.ne.s32.totalorder %s40, %s41
    %p53 = scmp.eq.s32.totalorder %s15, 1
    %p54 = por %p52, %p53
    %p56 = scmp.ne.s32.totalorder %s41, %s55
    %p57 = scmp.eq.s32.totalorder %s15, 0
    %p58 = por %p56, %p57
    %s60 = sadd.s32 %s59, 1
    %p63 = scmp.eq.s32.totalorder %s9, 1
    %p64 = scmp.ne.s32.totalorder %s59, %s61
    %p65 = scmp.eq.s32.totalorder %s9, 0
    %p66 = por %p64, %p65
    %p67 = scmp.ne.s32.totalorder %s59, %s61
    %p68 = scmp.eq.s32.totalorder %s14, 1
    %p69 = por %p67, %p68
    %p70 = scmp.ne.s32.totalorder %s61, %s62
    %p71 = scmp.eq.s32.totalorder %s14, 0
    %p72 = por %p70, %p71
    %p73 = scmp.ne.s32.totalorder %s61, %s62
    %p74 = scmp.eq.s32.totalorder %s15, 1
    %p75 = por %p73, %p74
    %p77 = scmp.ne.s32.totalorder %s62, %s76
    %p78 = scmp.eq.s32.totalorder %s15, 0
    %p79 = por %p77, %p78
    %s80 = ssub.s32 %s9, %s16
    %p81 = scmp.eq.s32.totalorder %s80, 0
    %s83 = sadd.s32 %s82, 1
    %s84 = scalar_select %p81, %s82, %s83
    %p87 = pneg %p81
    %p88 = scmp.eq.s32.totalorder %s9, 1
    %p89 = por %p87, %p88
    %p90 = scmp.ne.s32.totalorder %s82, %s85
    %p91 = scmp.eq.s32.totalorder %s9, 0
    %p92 = por %p90, %p91
    %p93 = scmp.ne.s32.totalorder %s82, %s85
    %p94 = scmp.eq.s32.totalorder %s14, 1
    %p95 = por %p93, %p94
    %p96 = scmp.ne.s32.totalorder %s85, %s86
    %p97 = scmp.eq.s32.totalorder %s14, 0
    %p98 = por %p96, %p97
    %p99 = scmp.ne.s32.totalorder %s85, %s86
    %p100 = scmp.eq.s32.totalorder %s15, 1
    %p101 = por %p99, %p100
    %p103 = scmp.ne.s32.totalorder %s86, %s102
    %p104 = scmp.eq.s32.totalorder %s15, 0
    %p105 = por %p103, %p104
    %p106 = scmp.le.s32.totalorder 1, %s9
    %p107 = scmp.lt.s32.totalorder %s9, 3
    %p108 = pnand %p106, %p107
    %p109 = pneg %p108
    // Predicated region
    $region9: #{tpu_custom_call.1} parent=5 // pred_check
      _
    $region10: #{tpu_custom_call.1} parent=5 // pred_check_branch
      %111 = sbr.rel (%p108) target = $region12
    $region11: #{tpu_custom_call.1} parent=5 // pred_region
      %s112 = ssub.s32 %s9, 1
      // Predicated region
      $region13: #{tpu_custom_call.1} parent=11 // pred_check
        %p113 = pneg %p30
      $region14: #{tpu_custom_call.1} parent=11 // pred_check_branch
        %115 = sbr.rel (%p113) target = $region16
      $region15: #{tpu_custom_call.1} parent=11 // pred_region
        _
      $region16: #{tpu_custom_call.1} parent=11 // pred_fallthru
        _
      // Predicated region
      $region17: #{tpu_custom_call.1} parent=11 // pred_check
        %p116 = pneg %p51
      $region18: #{tpu_custom_call.1} parent=11 // pred_check_branch
        %118 = sbr.rel (%p116) target = $region20
      $region19: #{tpu_custom_call.1} parent=11 // pred_region
        _
      $region20: #{tpu_custom_call.1} parent=11 // pred_fallthru
        _
      // Predicated region
      $region21: #{tpu_custom_call.1} parent=11 // pred_check
        %p119 = pneg %p72
      $region22: #{tpu_custom_call.1} parent=11 // pred_check_branch
        %121 = sbr.rel (%p119) target = $region24
      $region23: #{tpu_custom_call.1} parent=11 // pred_region
        _
      $region24: #{tpu_custom_call.1} parent=11 // pred_fallthru
        _
    $region12: #{tpu_custom_call.1} parent=5 // pred_fallthru
      _
    %p122 = scmp.lt.s32.totalorder %s9, 2
    // Predicated region
    $region25: #{tpu_custom_call.1} parent=5 // pred_check
      %p123 = pneg %p122
    $region26: #{tpu_custom_call.1} parent=5 // pred_check_branch
      %125 = sbr.rel (%p123) target = $region28
    $region27: #{tpu_custom_call.1} parent=5 // pred_region
      _
    $region28: #{tpu_custom_call.1} parent=5 // pred_fallthru
      _
    %p126 = scmp.le.s32.totalorder 1, %s9
    %p127 = scmp.lt.s32.totalorder %s9, 3
    %p128 = pnand %p126, %p127
    %p129 = pneg %p128
    // Predicated region
    $region29: #{tpu_custom_call.1} parent=5 // pred_check
      _
    $region30: #{tpu_custom_call.1} parent=5 // pred_check_branch
      %131 = sbr.rel (%p128) target = $region32
    $region31: #{tpu_custom_call.1} parent=5 // pred_region
      %s132 = ssub.s32 %s9, 1
      %p133 = pneg %p30
      %p134 = pneg %p27
      %p135 = pneg %p51
      %p136 = pneg %p48
      %p137 = pneg %p72
      %p138 = pneg %p69
      %p139 = pneg %p98
      %p140 = pneg %p95
      %s141 = smul.u32 14, %s14
      %p142 = scmp.lt.s32.totalorder %s141, 27
      %s143 = scalar_select %p142, %s141, 27
      %s144 = smul.addr %s143, 8
      %s145 = scalar_lea.vmem %s3, %s144
      %s146 = smul.u32 14, %s14
      %p147 = scmp.lt.s32.totalorder %s146, 27
      %s148 = scalar_select %p147, %s146, 27
      %s149 = smul.addr %s148, 8
      %s150 = scalar_lea.vmem %s3, %s149
      %s151 = smul.u32 14, %s14
      %s153 = smul.u32 %s14, 112
      %s154 = sshra.s32 %s153, 3
      %s155 = sand.u32 %s153, 7
      %s156 = smul.addr %s154, 4
      %s157 = scalar_lea.vmem %s0, %s156
      %v158 = vld [vmem:[%s157] sm:$0xf]
      %v159 = vld [vmem:[%s157 + $0x4] sm:$0xf]
      %v160 = vld [vmem:[%s157 + $0x8] sm:$0xf]
      %v161 = vld [vmem:[%s157 + $0xc] sm:$0xf]
      %v162 = vld [vmem:[%s157 + $0x10] sm:$0xf]
      %v163 = vld [vmem:[%s157 + $0x14] sm:$0xf]
      %v164 = vld [vmem:[%s157 + $0x18] sm:$0xf]
      %v165 = vld [vmem:[%s157 + $0x1c] sm:$0xf]
      %v166 = vld [vmem:[%s157 + $0x20] sm:$0xf]
      %v167 = vld [vmem:[%s157 + $0x24] sm:$0xf]
      %v168 = vld [vmem:[%s157 + $0x28] sm:$0xf]
      %v169 = vld [vmem:[%s157 + $0x2c] sm:$0xf]
      %v170 = vld [vmem:[%s157 + $0x30] sm:$0xf]
      %v171 = vld [vmem:[%s157 + $0x34] sm:$0xf]
      %v172 = vld [vmem:[%s1] sm:$0xf]
      %v173 = vld [vmem:[%s1 + $0x4] sm:$0xf]
      %v174 = vld [vmem:[%s1 + $0x8] sm:$0xf]
      %v175 = vld [vmem:[%s1 + $0xc] sm:$0xf]
      %v176 = vld [vmem:[%s1 + $0x10] sm:$0xf]
      %v177 = vld [vmem:[%s1 + $0x14] sm:$0xf]
      %s178 = sadd.s32 %s153, 8
      %s179 = sshra.s32 %s178, 3
      %s180 = sand.u32 %s178, 7
      %s181 = smul.addr %s179, 4
      %s182 = scalar_lea.vmem %s0, %s181
      %v183 = vld [vmem:[%s182] sm:$0xf]
      %v184 = vld [vmem:[%s182 + $0x4] sm:$0xf]
      %v185 = vld [vmem:[%s182 + $0x8] sm:$0xf]
      %v186 = vld [vmem:[%s182 + $0xc] sm:$0xf]
      %v187 = vld [vmem:[%s182 + $0x10] sm:$0xf]
      %v188 = vld [vmem:[%s182 + $0x14] sm:$0xf]
      %v189 = vld [vmem:[%s182 + $0x18] sm:$0xf]
      %v190 = vld [vmem:[%s182 + $0x1c] sm:$0xf]
      %v191 = vld [vmem:[%s182 + $0x20] sm:$0xf]
      %v192 = vld [vmem:[%s182 + $0x24] sm:$0xf]
      %v193 = vld [vmem:[%s182 + $0x28] sm:$0xf]
      %v194 = vld [vmem:[%s182 + $0x2c] sm:$0xf]
      %v195 = vld [vmem:[%s182 + $0x30] sm:$0xf]
      %v196 = vld [vmem:[%s182 + $0x34] sm:$0xf]
      %s197 = scalar_lea.vmem %s1, 24
      %v198 = vld [vmem:[%s197] sm:$0xf]
      %v199 = vld [vmem:[%s197 + $0x4] sm:$0xf]
      %v200 = vld [vmem:[%s197 + $0x8] sm:$0xf]
      %v201 = vld [vmem:[%s197 + $0xc] sm:$0xf]
      %v202 = vld [vmem:[%s197 + $0x10] sm:$0xf]
      %v203 = vld [vmem:[%s197 + $0x14] sm:$0xf]
      %v218 = vunpack.c.l.b16 %v183
      %v219 = vunpack.c.l.b16 %v184
      %v220 = vunpack.c.l.b16 %v185
      %v221 = vunpack.c.l.b16 %v186
      %v222 = vunpack.c.l.b16 %v187
      %v223 = vunpack.c.l.b16 %v188
      %v224 = vunpack.c.l.b16 %v189
      %v225 = vunpack.c.l.b16 %v190
      %v226 = vunpack.c.l.b16 %v191
      %v227 = vunpack.c.l.b16 %v192
      %v228 = vunpack.c.l.b16 %v193
      %v229 = vunpack.c.l.b16 %v194
      %v230 = vunpack.c.l.b16 %v195
      %v231 = vunpack.c.l.b16 %v196
      %v232 = vpack.c.b16 %v219, %v218
      %v233 = vpack.c.b16 %v221, %v220
      %v234 = vpack.c.b16 %v223, %v222
      %v235 = vpack.c.b16 %v225, %v224
      %v236 = vpack.c.b16 %v227, %v226
      %v237 = vpack.c.b16 %v229, %v228
      %v238 = vpack.c.b16 %v231, %v230
      %v245 = vunpack.c.l.b16 %v198
      %v246 = vunpack.c.l.b16 %v199
      %v247 = vunpack.c.l.b16 %v200
      %v248 = vunpack.c.l.b16 %v201
      %v249 = vunpack.c.l.b16 %v202
      %v250 = vunpack.c.l.b16 %v203
      %v251 = vpack.c.b16 %v246, %v245
      %v252 = vpack.c.b16 %v248, %v247
      %v253 = vpack.c.b16 %v250, %v249
      %vm257 = vcmask 392192
      %v259 = vsel %vm257, %v232, 0
      %v262 = vsel %vm257, %v233, 0
      %v265 = vsel %vm257, %v234, 0
      %v268 = vsel %vm257, %v235, 0
      %v271 = vsel %vm257, %v236, 0
      %v274 = vsel %vm257, %v237, 0
      %v277 = vsel %vm257, %v238, 0
      %279 = vmatprep.subr.bf16.mxu0 0
      %280 = vmatpush1.bf16.msra.mxu0 %v251
      %281 = vmatprep.subr.bf16.mxu0 0
      %282 = vmatpush1.bf16.msra.mxu0 %v252
      %283 = vmatprep.subr.bf16.mxu0 0
      %284 = vmatpush1.bf16.msra.mxu0 %v253
      %285 = vmatprep.subr.bf16.mxu0 0
      %286 = vmatpush1.bf16.msra.mxu0 0
      %287 = vmatprep.subr.bf16.mxu0 0
      %288 = vmatpush1.bf16.msra.mxu0 0
      %289 = vmatprep.subr.bf16.mxu0 0
      %290 = vmatpush1.bf16.msra.mxu0 0
      %291 = vmatprep.subr.bf16.mxu0 0
      %292 = vmatpush1.bf16.msra.mxu0 0
      %293 = vmatprep.subr.bf16.mxu0 0
      %294 = vmatpush1.bf16.msra.mxu0 0
      %295 = vmatprep.subr.bf16.mxu0 0
      %296 = vmatpush1.bf16.msra.mxu0 0
      %297 = vmatprep.subr.bf16.mxu0 0
      %298 = vmatpush1.bf16.msra.mxu0 0
      %299 = vmatprep.subr.bf16.mxu0 0
      %300 = vmatpush1.bf16.msra.mxu0 0
      %301 = vmatprep.subr.bf16.mxu0 0
      %302 = vmatpush1.bf16.msra.mxu0 0
      %303 = vmatprep.subr.bf16.mxu0 0
      %304 = vmatpush1.bf16.msra.mxu0 0
      %305 = vmatprep.subr.bf16.mxu0 0
      %306 = vmatpush1.bf16.msra.mxu0 0
      %307 = vmatprep.subr.bf16.mxu0 0
      %308 = vmatpush1.bf16.msra.mxu0 0
      %309 = vmatprep.subr.bf16.mxu0 0
      %310 = vmatpush1.bf16.msra.mxu0 0
      %311 = vmatprep.mubr.bf16.mxu0 0
      %312 = vmatmul.mubr.bf16.gmra.mrb[0].mxu0 %v259
      %v313 = vpop.f32.mrb[0].mxu0
      %v314 = vadd.f32 0.0, %v313
      %v315 = vpop.f32.mrb[0].mxu0
      %v316 = vpop.f32.mrb[0].mxu0
      %v317 = vadd.f32 0.0, %v316
      %v318 = vpop.f32.mrb[0].mxu0
      %319 = vmatprep.mubr.bf16.mxu0 0
      %320 = vmatmul.mubr.bf16.gmra.mrb[0].mxu0 %v262
      %v321 = vpop.f32.mrb[0].mxu0
      %v322 = vadd.f32 0.0, %v321
      %v323 = vpop.f32.mrb[0].mxu0
      %v324 = vpop.f32.mrb[0].mxu0
      %v325 = vadd.f32 0.0, %v324
      %v326 = vpop.f32.mrb[0].mxu0
      %327 = vmatprep.mubr.bf16.mxu0 0
      %328 = vmatmul.mubr.bf16.gmra.mrb[0].mxu0 %v265
      %v329 = vpop.f32.mrb[0].mxu0
      %v330 = vadd.f32 0.0, %v329
      %v331 = vpop.f32.mrb[0].mxu0
      %v332 = vpop.f32.mrb[0].mxu0
      %v333 = vadd.f32 0.0, %v332
      %v334 = vpop.f32.mrb[0].mxu0
      %335 = vmatprep.mubr.bf16.mxu0 0
      %336 = vmatmul.mubr.bf16.gmra.mrb[0].mxu0 %v268
      %v337 = vpop.f32.mrb[0].mxu0
      %v338 = vadd.f32 0.0, %v337
      %v339 = vpop.f32.mrb[0].mxu0
      %v340 = vpop.f32.mrb[0].mxu0
      %v341 = vadd.f32 0.0, %v340
      %v342 = vpop.f32.mrb[0].mxu0
      %343 = vmatprep.mubr.bf16.mxu0 0
      %344 = vmatmul.mubr.bf16.gmra.mrb[0].mxu0 %v271
      %v345 = vpop.f32.mrb[0].mxu0
      %v346 = vadd.f32 0.0, %v345
      %v347 = vpop.f32.mrb[0].mxu0
      %v348 = vpop.f32.mrb[0].mxu0
      %v349 = vadd.f32 0.0, %v348
      %v350 = vpop.f32.mrb[0].mxu0
      %351 = vmatprep.mubr.bf16.mxu0 0
      %352 = vmatmul.mubr.bf16.gmra.mrb[0].mxu0 %v274
      %v353 = vpop.f32.mrb[0].mxu0
      %v354 = vadd.f32 0.0, %v353
      %v355 = vpop.f32.mrb[0].mxu0
      %v356 = vpop.f32.mrb[0].mxu0
      %v357 = vadd.f32 0.0, %v356
      %v358 = vpop.f32.mrb[0].mxu0
      %359 = vmatprep.mubr.bf16.mxu0 0
      %360 = vmatmul.mubr.bf16.gmra.mrb[0].mxu0 %v277
      %v361 = vpop.f32.mrb[0].mxu0
      %v362 = vadd.f32 0.0, %v361
      %v363 = vpop.f32.mrb[0].mxu0
      %v364 = vpop.f32.mrb[0].mxu0
      %v365 = vadd.f32 0.0, %v364
      %v366 = vpop.f32.mrb[0].mxu0
      %367 = vdwg.mxu0
      %v382 = vunpack.c.l.b16 %v158
      %v383 = vunpack.c.l.b16 %v159
      %v384 = vunpack.c.l.b16 %v160
      %v385 = vunpack.c.l.b16 %v161
      %v386 = vunpack.c.l.b16 %v162
      %v387 = vunpack.c.l.b16 %v163
      %v388 = vunpack.c.l.b16 %v164
      %v389 = vunpack.c.l.b16 %v165
      %v390 = vunpack.c.l.b16 %v166
      %v391 = vunpack.c.l.b16 %v167
      %v392 = vunpack.c.l.b16 %v168
      %v393 = vunpack.c.l.b16 %v169
      %v394 = vunpack.c.l.b16 %v170
      %v395 = vunpack.c.l.b16 %v171
      %v396 = vpack.c.b16 %v383, %v382
      %v397 = vpack.c.b16 %v385, %v384
      %v398 = vpack.c.b16 %v387, %v386
      %v399 = vpack.c.b16 %v389, %v388
      %v400 = vpack.c.b16 %v391, %v390
      %v401 = vpack.c.b16 %v393, %v392
      %v402 = vpack.c.b16 %v395, %v394
      %v409 = vunpack.c.l.b16 %v172
      %v410 = vunpack.c.l.b16 %v173
      %v411 = vunpack.c.l.b16 %v174
      %v412 = vunpack.c.l.b16 %v175
      %v413 = vunpack.c.l.b16 %v176
      %v414 = vunpack.c.l.b16 %v177
      %v415 = vpack.c.b16 %v410, %v409
      %v416 = vpack.c.b16 %v412, %v411
      %v417 = vpack.c.b16 %v414, %v413
      %v422 = vsel %vm257, %v396, 0
      %v425 = vsel %vm257, %v397, 0
      %v428 = vsel %vm257, %v398, 0
      %v431 = vsel %vm257, %v399, 0
      %v434 = vsel %vm257, %v400, 0
      %v437 = vsel %vm257, %v401, 0
      %v440 = vsel %vm257, %v402, 0
      %442 = vmatprep.subr.bf16.mxu0 0
      %443 = vmatpush1.bf16.msra.mxu0 %v415
      %444 = vmatprep.subr.bf16.mxu0 0
      %445 = vmatpush1.bf16.msra.mxu0 %v416
      %446 = vmatprep.subr.bf16.mxu0 0
      %447 = vmatpush1.bf16.msra.mxu0 %v417
      %448 = vmatprep.subr.bf16.mxu0 0
      %449 = vmatpush1.bf16.msra.mxu0 0
      %450 = vmatprep.subr.bf16.mxu0 0
      %451 = vmatpush1.bf16.msra.mxu0 0
      %452 = vmatprep.subr.bf16.mxu0 0
      %453 = vmatpush1.bf16.msra.mxu0 0
      %454 = vmatprep.subr.bf16.mxu0 0
      %455 = vmatpush1.bf16.msra.mxu0 0
      %456 = vmatprep.subr.bf16.mxu0 0
      %457 = vmatpush1.bf16.msra.mxu0 0
      %458 = vmatprep.subr.bf16.mxu0 0
      %459 = vmatpush1.bf16.msra.mxu0 0
      %460 = vmatprep.subr.bf16.mxu0 0
      %461 = vmatpush1.bf16.msra.mxu0 0
      %462 = vmatprep.subr.bf16.mxu0 0
      %463 = vmatpush1.bf16.msra.mxu0 0
      %464 = vmatprep.subr.bf16.mxu0 0
      %465 = vmatpush1.bf16.msra.mxu0 0
      %466 = vmatprep.subr.bf16.mxu0 0
      %467 = vmatpush1.bf16.msra.mxu0 0
      %468 = vmatprep.subr.bf16.mxu0 0
      %469 = vmatpush1.bf16.msra.mxu0 0
      %470 = vmatprep.subr.bf16.mxu0 0
      %471 = vmatpush1.bf16.msra.mxu0 0
      %472 = vmatprep.subr.bf16.mxu0 0
      %473 = vmatpush1.bf16.msra.mxu0 0
      %474 = vmatprep.mubr.bf16.mxu0 0
      %475 = vmatmul.mubr.bf16.gmra.mrb[0].mxu0 %v422
      %v476 = vpop.f32.mrb[0].mxu0
      %v477 = vadd.f32 %v314, %v476
      %v478 = vpop.f32.mrb[0].mxu0
      %v479 = vpop.f32.mrb[0].mxu0
      %v480 = vadd.f32 %v317, %v479
      %v481 = vpop.f32.mrb[0].mxu0
      %482 = vmatprep.mubr.bf16.mxu0 0
      %483 = vmatmul.mubr.bf16.gmra.mrb[0].mxu0 %v425
      %v484 = vpop.f32.mrb[0].mxu0
      %v485 = vadd.f32 %v322, %v484
      %v486 = vpop.f32.mrb[0].mxu0
      %v487 = vpop.f32.mrb[0].mxu0
      %v488 = vadd.f32 %v325, %v487
      %v489 = vpop.f32.mrb[0].mxu0
      %490 = vmatprep.mubr.bf16.mxu0 0
      %491 = vmatmul.mubr.bf16.gmra.mrb[0].mxu0 %v428
      %v492 = vpop.f32.mrb[0].mxu0
      %v493 = vadd.f32 %v330, %v492
      %v494 = vpop.f32.mrb[0].mxu0
      %v495 = vpop.f32.mrb[0].mxu0
      %v496 = vadd.f32 %v333, %v495
      %v497 = vpop.f32.mrb[0].mxu0
      %498 = vmatprep.mubr.bf16.mxu0 0
      %499 = vmatmul.mubr.bf16.gmra.mrb[0].mxu0 %v431
      %v500 = vpop.f32.mrb[0].mxu0
      %v501 = vadd.f32 %v338, %v500
      %v502 = vpop.f32.mrb[0].mxu0
      %v503 = vpop.f32.mrb[0].mxu0
      %v504 = vadd.f32 %v341, %v503
      %v505 = vpop.f32.mrb[0].mxu0
      %506 = vmatprep.mubr.bf16.mxu0 0
      %507 = vmatmul.mubr.bf16.gmra.mrb[0].mxu0 %v434
      %v508 = vpop.f32.mrb[0].mxu0
      %v509 = vadd.f32 %v346, %v508
      %v510 = vpop.f32.mrb[0].mxu0
      %v511 = vpop.f32.mrb[0].mxu0
      %v512 = vadd.f32 %v349, %v511
      %v513 = vpop.f32.mrb[0].mxu0
      %514 = vmatprep.mubr.bf16.mxu0 0
      %515 = vmatmul.mubr.bf16.gmra.mrb[0].mxu0 %v437
      %v516 = vpop.f32.mrb[0].mxu0
      %v517 = vadd.f32 %v354, %v516
      %v518 = vpop.f32.mrb[0].mxu0
      %v519 = vpop.f32.mrb[0].mxu0
      %v520 = vadd.f32 %v357, %v519
      %v521 = vpop.f32.mrb[0].mxu0
      %522 = vmatprep.mubr.bf16.mxu0 0
      %523 = vmatmul.mubr.bf16.gmra.mrb[0].mxu0 %v440
      %v524 = vpop.f32.mrb[0].mxu0
      %v525 = vadd.f32 %v362, %v524
      %v526 = vpop.f32.mrb[0].mxu0
      %v527 = vpop.f32.mrb[0].mxu0
      %v528 = vadd.f32 %v365, %v527
      %v529 = vpop.f32.mrb[0].mxu0
      %530 = vdwg.mxu0
      %s531 = sadd.s32 %s153, 16
      %s532 = sshra.s32 %s531, 3
      %s533 = sand.u32 %s531, 7
      %s534 = smul.addr %s532, 4
      %s535 = scalar_lea.vmem %s0, %s534
      %v536 = vld [vmem:[%s535] sm:$0xf]
      %v537 = vld [vmem:[%s535 + $0x4] sm:$0xf]
      %v538 = vld [vmem:[%s535 + $0x8] sm:$0xf]
      %v539 = vld [vmem:[%s535 + $0xc] sm:$0xf]
      %v540 = vld [vmem:[%s535 + $0x10] sm:$0xf]
      %v541 = vld [vmem:[%s535 + $0x14] sm:$0xf]
      %v542 = vld [vmem:[%s535 + $0x18] sm:$0xf]
      %v543 = vld [vmem:[%s535 + $0x1c] sm:$0xf]
      %v544 = vld [vmem:[%s535 + $0x20] sm:$0xf]
      %v545 = vld [vmem:[%s535 + $0x24] sm:$0xf]
      %v546 = vld [vmem:[%s535 + $0x28] sm:$0xf]
      %v547 = vld [vmem:[%s535 + $0x2c] sm:$0xf]
      %v548 = vld [vmem:[%s535 + $0x30] sm:$0xf]
      %v549 = vld [vmem:[%s535 + $0x34] sm:$0xf]
      %s550 = scalar_lea.vmem %s1, 48
      %v551 = vld [vmem:[%s550] sm:$0xf]
      %v552 = vld [vmem:[%s550 + $0x4] sm:$0xf]
      %v553 = vld [vmem:[%s550 + $0x8] sm:$0xf]
      %v554 = vld [vmem:[%s550 + $0xc] sm:$0xf]
      %v555 = vld [vmem:[%s550 + $0x10] sm:$0xf]
      %v556 = vld [vmem:[%s550 + $0x14] sm:$0xf]
      %v571 = vunpack.c.l.b16 %v536
      %v572 = vunpack.c.l.b16 %v537
      %v573 = vunpack.c.l.b16 %v538
      %v574 = vunpack.c.l.b16 %v539
      %v575 = vunpack.c.l.b16 %v540
      %v576 = vunpack.c.l.b16 %v541
      %v577 = vunpack.c.l.b16 %v542
      %v578 = vunpack.c.l.b16 %v543
      %v579 = vunpack.c.l.b16 %v544
      %v580 = vunpack.c.l.b16 %v545
      %v581 = vunpack.c.l.b16 %v546
      %v582 = vunpack.c.l.b16 %v547
      %v583 = vunpack.c.l.b16 %v548
      %v584 = vunpack.c.l.b16 %v549
      %v585 = vpack.c.b16 %v572, %v571
      %v586 = vpack.c.b16 %v574, %v573
      %v587 = vpack.c.b16 %v576, %v575
      %v588 = vpack.c.b16 %v578, %v577
      %v589 = vpack.c.b16 %v580, %v579
      %v590 = vpack.c.b16 %v582, %v581
      %v591 = vpack.c.b16 %v584, %v583
      %v598 = vunpack.c.l.b16 %v551
      %v599 = vunpack.c.l.b16 %v552
      %v600 = vunpack.c.l.b16 %v553
      %v601 = vunpack.c.l.b16 %v554
      %v602 = vunpack.c.l.b16 %v555
      %v603 = vunpack.c.l.b16 %v556
      %v604 = vpack.c.b16 %v599, %v598
      %v605 = vpack.c.b16 %v601, %v600
      %v606 = vpack.c.b16 %v603, %v602
      %v611 = vsel %vm257, %v585, 0
      %v614 = vsel %vm257, %v586, 0
      %v617 = vsel %vm257, %v587, 0
      %v620 = vsel %vm257, %v588, 0
      %v623 = vsel %vm257, %v589, 0
      %v626 = vsel %vm257, %v590, 0
      %v629 = vsel %vm257, %v591, 0
      %631 = vmatprep.subr.bf16.mxu0 0
      %632 = vmatpush1.bf16.msra.mxu0 %v604
      %633 = vmatprep.subr.bf16.mxu0 0
      %634 = vmatpush1.bf16.msra.mxu0 %v605
      %635 = vmatprep.subr.bf16.mxu0 0
      %636 = vmatpush1.bf16.msra.mxu0 %v606
      %637 = vmatprep.subr.bf16.mxu0 0
      %638 = vmatpush1.bf16.msra.mxu0 0
      %639 = vmatprep.subr.bf16.mxu0 0
      %640 = vmatpush1.bf16.msra.mxu0 0
      %641 = vmatprep.subr.bf16.mxu0 0
      %642 = vmatpush1.bf16.msra.mxu0 0
      %643 = vmatprep.subr.bf16.mxu0 0
      %644 = vmatpush1.bf16.msra.mxu0 0
      %645 = vmatprep.subr.bf16.mxu0 0
      %646 = vmatpush1.bf16.msra.mxu0 0
      %647 = vmatprep.subr.bf16.mxu0 0
      %648 = vmatpush1.bf16.msra.mxu0 0
      %649 = vmatprep.subr.bf16.mxu0 0
      %650 = vmatpush1.bf16.msra.mxu0 0
      %651 = vmatprep.subr.bf16.mxu0 0
      %652 = vmatpush1.bf16.msra.mxu0 0
      %653 = vmatprep.subr.bf16.mxu0 0
      %654 = vmatpush1.bf16.msra.mxu0 0
      %655 = vmatprep.subr.bf16.mxu0 0
      %656 = vmatpush1.bf16.msra.mxu0 0
      %657 = vmatprep.subr.bf16.mxu0 0
      %658 = vmatpush1.bf16.msra.mxu0 0
      %659 = vmatprep.subr.bf16.mxu0 0
      %660 = vmatpush1.bf16.msra.mxu0 0
      %661 = vmatprep.subr.bf16.mxu0 0
      %662 = vmatpush1.bf16.msra.mxu0 0
      %663 = vmatprep.mubr.bf16.mxu0 0
      %664 = vmatmul.mubr.bf16.gmra.mrb[0].mxu0 %v611
      %v665 = vpop.f32.mrb[0].mxu0
      %v666 = vadd.f32 0.0, %v665
      %v667 = vpop.f32.mrb[0].mxu0
      %v668 = vpop.f32.mrb[0].mxu0
      %v669 = vadd.f32 0.0, %v668
      %v670 = vpop.f32.mrb[0].mxu0
      %671 = vmatprep.mubr.bf16.mxu0 0
      %672 = vmatmul.mubr.bf16.gmra.mrb[0].mxu0 %v614
      %v673 = vpop.f32.mrb[0].mxu0
      %v674 = vadd.f32 0.0, %v673
      %v675 = vpop.f32.mrb[0].mxu0
      %v676 = vpop.f32.mrb[0].mxu0
      %v677 = vadd.f32 0.0, %v676
      %v678 = vpop.f32.mrb[0].mxu0
      %679 = vmatprep.mubr.bf16.mxu0 0
      %680 = vmatmul.mubr.bf16.gmra.mrb[0].mxu0 %v617
      %v681 = vpop.f32.mrb[0].mxu0
      %v682 = vadd.f32 0.0, %v681
      %v683 = vpop.f32.mrb[0].mxu0
      %v684 = vpop.f32.mrb[0].mxu0
      %v685 = vadd.f32 0.0, %v684
      %v686 = vpop.f32.mrb[0].mxu0
      %687 = vmatprep.mubr.bf16.mxu0 0
      %688 = vmatmul.mubr.bf16.gmra.mrb[0].mxu0 %v620
      %v689 = vpop.f32.mrb[0].mxu0
      %v690 = vadd.f32 0.0, %v689
      %v691 = vpop.f32.mrb[0].mxu0
      %v692 = vpop.f32.mrb[0].mxu0
      %v693 = vadd.f32 0.0, %v692
      %v694 = vpop.f32.mrb[0].mxu0
      %695 = vmatprep.mubr.bf16.mxu0 0
      %696 = vmatmul.mubr.bf16.gmra.mrb[0].mxu0 %v623
      %v697 = vpop.f32.mrb[0].mxu0
      %v698 = vadd.f32 0.0, %v697
      %v699 = vpop.f32.mrb[0].mxu0
      %v700 = vpop.f32.mrb[0].mxu0
      %v701 = vadd.f32 0.0, %v700
      %v702 = vpop.f32.mrb[0].mxu0
      %703 = vmatprep.mubr.bf16.mxu0 0
      %704 = vmatmul.mubr.bf16.gmra.mrb[0].mxu0 %v626
      %v705 = vpop.f32.mrb[0].mxu0
      %v706 = vadd.f32 0.0, %v705
      %v707 = vpop.f32.mrb[0].mxu0
      %v708 = vpop.f32.mrb[0].mxu0
      %v709 = vadd.f32 0.0, %v708
      %v710 = vpop.f32.mrb[0].mxu0
      %711 = vmatprep.mubr.bf16.mxu0 0
      %712 = vmatmul.mubr.bf16.gmra.mrb[0].mxu0 %v629
      %v713 = vpop.f32.mrb[0].mxu0
      %v714 = vadd.f32 0.0, %v713
      %v715 = vpop.f32.mrb[0].mxu0
      %v716 = vpop.f32.mrb[0].mxu0
      %v717 = vadd.f32 0.0, %v716
      %v718 = vpop.f32.mrb[0].mxu0
      %719 = vdwg.mxu0
      %v720 = vadd.f32 %v477, %v666
      %v721 = vadd.f32 %v480, %v669
      %v722 = vadd.f32 %v485, %v674
      %v723 = vadd.f32 %v488, %v677
      %v724 = vadd.f32 %v493, %v682
      %v725 = vadd.f32 %v496, %v685
      %v726 = vadd.f32 %v501, %v690
      %v727 = vadd.f32 %v504, %v693
      %v728 = vadd.f32 %v509, %v698
      %v729 = vadd.f32 %v512, %v701
      %v730 = vadd.f32 %v517, %v706
      %v731 = vadd.f32 %v520, %v709
      %v732 = vadd.f32 %v525, %v714
      %v733 = vadd.f32 %v528, %v717
      %v734 = vld [vmem:[%s2] sm:$0x1]
      %v736 = vlaneseq
      %v737 = vshrl.u32 %v736, 7
      %v738 = vsub.s32 0, %v737
      %v739 = vrot.slane %v734, %v738
      %v741 = vadd.f32 %v720, %v739
      %v742 = vadd.f32 %v721, %v739
      %v743 = vadd.f32 %v722, %v739
      %v744 = vadd.f32 %v723, %v739
      %v745 = vadd.f32 %v724, %v739
      %v746 = vadd.f32 %v725, %v739
      %v747 = vadd.f32 %v726, %v739
      %v748 = vadd.f32 %v727, %v739
      %v749 = vadd.f32 %v728, %v739
      %v750 = vadd.f32 %v729, %v739
      %v751 = vadd.f32 %v730, %v739
      %v752 = vadd.f32 %v731, %v739
      %v753 = vadd.f32 %v732, %v739
      %v754 = vadd.f32 %v733, %v739
      %vm755 = vcmask 261120
      %756 = vst.msk [vmem:[%s150] sm:$0xff] %vm755, %v741
      %757 = vst.msk [vmem:[%s150 + $0x8] sm:$0xff] %vm755, %v742
      %758 = vst.msk [vmem:[%s150 + $0x10] sm:$0xff] %vm755, %v743
      %759 = vst.msk [vmem:[%s150 + $0x18] sm:$0xff] %vm755, %v744
      %760 = vst.msk [vmem:[%s150 + $0x20] sm:$0xff] %vm755, %v745
      %761 = vst.msk [vmem:[%s150 + $0x28] sm:$0xff] %vm755, %v746
      %762 = vst.msk [vmem:[%s150 + $0x30] sm:$0xff] %vm755, %v747
      %763 = vst.msk [vmem:[%s150 + $0x38] sm:$0xff] %vm755, %v748
      %764 = vst.msk [vmem:[%s150 + $0x40] sm:$0xff] %vm755, %v749
      %765 = vst.msk [vmem:[%s150 + $0x48] sm:$0xff] %vm755, %v750
      %766 = vst.msk [vmem:[%s150 + $0x50] sm:$0xff] %vm755, %v751
      %767 = vst.msk [vmem:[%s150 + $0x58] sm:$0xff] %vm755, %v752
      %768 = vst.msk [vmem:[%s150 + $0x60] sm:$0xff] %vm755, %v753
      %769 = vst.msk [vmem:[%s150 + $0x68] sm:$0xff] %vm755, %v754
      %s770 = smul.u32 14, %s14
      %p771 = scmp.lt.s32.totalorder %s770, 27
      %s772 = scalar_select %p771, %s770, 27
      %s773 = smul.addr %s772, 8
      %s774 = scalar_lea.vmem %s3, %s773
      // Predicated region
      $region33: #{tpu_custom_call.1} parent=31 // pred_check
        %p775 = pneg %p95
      $region34: #{tpu_custom_call.1} parent=31 // pred_check_branch
        %777 = sbr.rel (%p775) target = $region36
      $region35: #{tpu_custom_call.1} parent=31 // pred_region
        %s778 = smul.u32 14, %s14
      $region36: #{tpu_custom_call.1} parent=31 // pred_fallthru
        _
    $region32: #{tpu_custom_call.1} parent=5 // pred_fallthru
      _
    %p779 = scmp.le.s32.totalorder 2, %s9
    // Predicated region
    $region37: #{tpu_custom_call.1} parent=5 // pred_check
      %p780 = pneg %p779
    $region38: #{tpu_custom_call.1} parent=5 // pred_check_branch
      %782 = sbr.rel (%p780) target = $region40
    $region39: #{tpu_custom_call.1} parent=5 // pred_region
      %s783 = ssub.s32 %s9, 2
      // Predicated region
      $region41: #{tpu_custom_call.1} parent=39 // pred_check
        %p784 = pneg %p101
      $region42: #{tpu_custom_call.1} parent=39 // pred_check_branch
        %786 = sbr.rel (%p784) target = $region44
      $region43: #{tpu_custom_call.1} parent=39 // pred_region
        %s787 = smul.u32 14, %s15
        %p788 = scmp.lt.s32.totalorder %s787, 27
        %s789 = scalar_select %p788, %s787, 27
        %s790 = smul.addr %s789, 8
        %s791 = scalar_lea.vmem %s3, %s790
      $region44: #{tpu_custom_call.1} parent=39 // pred_fallthru
        _
    $region40: #{tpu_custom_call.1} parent=5 // pred_fallthru
      _
  $region6: #{tpu_custom_call.1} parent=0 // loop_footer
    %s13 = sadd.s32 1, %s9
  $region7: #{tpu_custom_call.1} parent=0 // loop_footer_branch
    %8 = sbr.rel target = $region3
  $region8: #{tpu_custom_call.1} parent=0 // loop_exit
    _

</llo_original>
